<compile_context>
chip_gen: v5e
topology: v5e:2x2
jax: 0.10.0
libtpu: 0.0.40
codegen_flags: <defaults>
</compile_context>

<pallas_src>
import functools

import jax
import jax.numpy as jnp
from jax.experimental import pallas as pl
from jax.experimental.pallas import tpu as pltpu

HP = 128          # padded hidden / output lane width (one full lane tile)
BF16_SUB = 16     # bf16 sublane tile (16, 128)
F32_SUB = 8       # f32 sublane tile (8, 128)


def _round_up(n, m):
    return (n + m - 1) // m * m


def init_params(key, input_dim, output_dim, hidden=64):
    """PyTorch-Linear-style uniform init; weights stored [in_features, out_features]."""
    ks = jax.random.split(key, 6)

    def linear(kw, kb, fan_in, fan_out):
        bound = 1.0 / float(fan_in) ** 0.5
        w = jax.random.uniform(kw, (fan_in, fan_out), jnp.float32, -bound, bound)
        b = jax.random.uniform(kb, (fan_out,), jnp.float32, -bound, bound)
        return w, b

    w1, b1 = linear(ks[0], ks[1], input_dim, hidden)
    w2, b2 = linear(ks[2], ks[3], hidden, hidden)
    w3, b3 = linear(ks[4], ks[5], hidden, output_dim)
    return {"w1": w1, "b1": b1, "w2": w2, "b2": b2, "w3": w3, "b3": b3}


def pack_params(params, in_dim, hidden, out_dim):
    """Pack weights into one bf16 [rows,128] buffer (16-row-aligned segments) and the three
    biases into a small f32 [24,128] buffer (rows 0 / 8 / 16, each on an f32 tile boundary)."""
    assert hidden <= HP and out_dim <= HP
    in_pad = _round_up(in_dim, BF16_SUB)
    w1 = jnp.zeros((in_pad, HP), jnp.float32).at[:in_dim, :hidden].set(params["w1"])
    w2 = jnp.zeros((HP, HP), jnp.float32).at[:hidden, :hidden].set(params["w2"])
    w3 = jnp.zeros((HP, HP), jnp.float32).at[:hidden, :out_dim].set(params["w3"])
    w_packed = jnp.concatenate([w1, w2, w3], axis=0).astype(jnp.bfloat16)   # [in_pad+256, 128]

    biases = jnp.zeros((3 * F32_SUB, HP), jnp.float32)
    biases = biases.at[0, :hidden].set(params["b1"])
    biases = biases.at[F32_SUB, :hidden].set(params["b2"])
    biases = biases.at[2 * F32_SUB, :out_dim].set(params["b3"])
    return w_packed, biases


def _mlp(x_bf16, w_ref, b_ref, in_dim):
    """Fused 3-layer MLP on a [tb, in_dim] bf16 tile. Returns [tb, 128] f32 (lane-padded)."""
    w_off = _round_up(in_dim, BF16_SUB)
    w1 = w_ref[0:in_dim, :]                      # [in_dim, 128] bf16
    w2 = w_ref[w_off:w_off + HP, :]              # [128, 128]   bf16
    w3 = w_ref[w_off + HP:w_off + 2 * HP, :]     # [128, 128]   bf16
    b1 = b_ref[0:1, :]                           # [1, 128] f32
    b2 = b_ref[F32_SUB:F32_SUB + 1, :]
    b3 = b_ref[2 * F32_SUB:2 * F32_SUB + 1, :]

    h1 = jnp.dot(x_bf16, w1, preferred_element_type=jnp.float32) + b1      # f32 accumulate
    h1 = jnp.maximum(h1, 0.0)
    h2 = jnp.dot(h1.astype(jnp.bfloat16), w2, preferred_element_type=jnp.float32) + b2
    h2 = jnp.maximum(h2, 0.0)
    return jnp.dot(h2.astype(jnp.bfloat16), w3, preferred_element_type=jnp.float32) + b3


def qnet_kernel(x_ref, w_ref, b_ref, o_ref, *, in_dim):
    """Batched forward: one [tb, in_dim] f32 tile -> lane-dense bf16 [tb, 128] Q-slab."""
    q = _mlp(x_ref[...].astype(jnp.bfloat16), w_ref, b_ref, in_dim)
    o_ref[...] = q.astype(o_ref.dtype)


def qnet_act_kernel(x_ref, w_ref, b_ref, a_ref, *, in_dim, out_dim):
    """Acting path (B=1): forward + fused greedy argmax -> single int32 in SMEM."""
    q = _mlp(x_ref[...].astype(jnp.bfloat16), w_ref, b_ref, in_dim)        # [1, 128] f32
    lane = jax.lax.broadcasted_iota(jnp.int32, q.shape, 1)
    q = jnp.where(lane < out_dim, q, -1e30)                                # mask padded lanes
    qmax = jnp.max(q, axis=-1, keepdims=True)
    cand = jnp.where(q >= qmax, lane, HP)                                  # first index of max
    a_ref[0, 0] = jnp.min(cand, axis=-1)[0]


def qnetwork_forward(x, w_packed, biases, *, in_dim, out_dim, block_b=2048, crop=True):
    """x: [B, in_dim] f32.  Returns [B, out_dim] f32 (crop=True) or the padded bf16
    [b_pad, 128] slab (crop=False; preferred for fused downstream loss/gather consumers)."""
    B = x.shape[0]
    assert x.shape[1] == in_dim

    grid_n = pl.cdiv(B, block_b)
    if grid_n == 1:
        # Whole batch as a single block: no padding, no extra XLA repack op, one grid step.
        tb, b_pad, x_in = B, B, x
    else:
        # Balanced tiles, 16-row aligned -> never pathological padding (e.g. B=600 -> 304x2).
        # On v7x pick block_b ~= cdiv(B, 2) so both TensorCores get a tile.
        tb = _round_up(pl.cdiv(B, grid_n), BF16_SUB)
        b_pad = grid_n * tb
        x_in = jnp.pad(x, ((0, b_pad - B), (0, 0)))      # batch-dim-only pad (cheap)

    flops = 2 * b_pad * (in_dim * HP + HP * HP + HP * HP)
    bytes_accessed = x_in.size * 4 + w_packed.size * 2 + biases.size * 4 + b_pad * HP * 2

    out = pl.pallas_call(
        functools.partial(qnet_kernel, in_dim=in_dim),
        out_shape=jax.ShapeDtypeStruct((b_pad, HP), jnp.bfloat16),
        grid_spec=pltpu.PrefetchScalarGridSpec(
            num_scalar_prefetch=0,
            grid=(grid_n,),
            in_specs=[
                pl.BlockSpec((tb, in_dim), lambda i: (i, 0)),       # batch tile, pipelined
                # Constant index_map -> the params are DMA'd once and reused every step.
                pl.BlockSpec(w_packed.shape, lambda i: (0, 0)),
                pl.BlockSpec(biases.shape, lambda i: (0, 0)),
            ],
            out_specs=pl.BlockSpec((tb, HP), lambda i: (i, 0)),     # lane-dense 128-wide stores
        ),
        compiler_params=pltpu.CompilerParams(
            dimension_semantics=("parallel",),                      # shard tiles across TCs
        ),
        cost_estimate=pl.CostEstimate(
            flops=flops, transcendentals=0, bytes_accessed=bytes_accessed),
    )(x_in, w_packed, biases)

    if crop:
        return out[:B, :out_dim].astype(jnp.float32)
    return out


def qnetwork_act(state, w_packed, biases, *, in_dim, out_dim):
    """Greedy action for a single state: fused forward+argmax, scalar int32 output."""
    state = state.reshape(1, in_dim).astype(jnp.float32)
    action = pl.pallas_call(
        functools.partial(qnet_act_kernel, in_dim=in_dim, out_dim=out_dim),
        out_shape=jax.ShapeDtypeStruct((1, 1), jnp.int32),
        in_specs=[
            pl.BlockSpec(memory_space=pltpu.MemorySpace.VMEM),
            pl.BlockSpec(memory_space=pltpu.MemorySpace.VMEM),
            pl.BlockSpec(memory_space=pltpu.MemorySpace.VMEM),
        ],
        out_specs=pl.BlockSpec(memory_space=pltpu.MemorySpace.SMEM),
    )(state, w_packed, biases)
    return action[0, 0]


if __name__ == "__main__":
    key = jax.random.PRNGKey(0)
    kx, kp = jax.random.split(key)

    # LunarLander-v2: state dim 8, action dim 4.
    batch, input_dim, hidden, output_dim = 20, 8, 64, 4
    x = jax.random.normal(kx, (batch, input_dim), dtype=jnp.float32)
    params = init_params(kp, input_dim, output_dim, hidden)
    w_packed, biases = pack_params(params, input_dim, hidden, output_dim)

    # Training-path forward: default block_b -> single grid step, no batch padding.
    q = qnetwork_forward(x, w_packed, biases, in_dim=input_dim, out_dim=output_dim)
    jax.block_until_ready(q)

    # Multi-step grid path (exercises batch padding + pipelined tiles); block_b=16 is only to
    # force grid=2 at this tiny demo batch — real training batches keep block_b large.
    q2 = qnetwork_forward(x, w_packed, biases, in_dim=input_dim, out_dim=output_dim, block_b=16)

    # Acting path: fused greedy argmax, no Q-value HBM round trip.
    a0 = int(qnetwork_act(x[0], w_packed, biases, in_dim=input_dim, out_dim=output_dim))

    # Pure-JAX reference with identical bf16 matmul inputs + f32 accumulation + f32 bias add.
    bf = lambda t: t.astype(jnp.bfloat16).astype(jnp.float32)
    hi = jax.lax.Precision.HIGHEST
    h1 = jnp.maximum(jnp.dot(bf(x), bf(params["w1"]), precision=hi) + params["b1"], 0.0)
    h2 = jnp.maximum(jnp.dot(bf(h1), bf(params["w2"]), precision=hi) + params["b2"], 0.0)
    ref = jnp.dot(bf(h2), bf(params["w3"]), precision=hi) + params["b3"]

    assert q.shape == (batch, output_dim)
    # Kernel output is bf16-rounded; tolerance covers one bf16 ulp at these magnitudes.
    assert jnp.allclose(q, ref, atol=2e-2, rtol=2e-2), float(jnp.max(jnp.abs(q - ref)))
    assert jnp.allclose(q2, q, atol=1e-6), float(jnp.max(jnp.abs(q2 - q)))
    assert float(ref[0, a0]) >= float(ref[0].max()) - 1e-2, (a0, ref[0])

    print("KERNEL_OK")
</pallas_src>

<mosaic_0001>
module attributes {stable_mosaic.version = 11 : i64} {
  func.func @qnet_kernel(%arg0: i32, %arg1: memref<20x8xf32, #tpu.memory_space<vmem>>, %arg2: memref<272x128xbf16, #tpu.memory_space<vmem>>, %arg3: memref<24x128xf32, #tpu.memory_space<vmem>>, %arg4: memref<20x128xbf16, #tpu.memory_space<vmem>>) attributes {dimension_semantics = [#tpu.dimension_semantics<parallel>], iteration_bounds = array<i64: 1>, scalar_prefetch = 0 : i64, scratch_operands = 0 : i64, tpu.core_type = #tpu.core_type<tc>, window_params = [{transform_indices = @transform_0, window_bounds = array<i64: 20, 8>}, {pipeline_mode = #tpu.pipeline_mode<synchronous>, transform_indices = @transform_1, window_bounds = array<i64: 272, 128>}, {pipeline_mode = #tpu.pipeline_mode<synchronous>, transform_indices = @transform_2, window_bounds = array<i64: 24, 128>}, {transform_indices = @transform_3, window_bounds = array<i64: 20, 128>}]} {
    %c0 = arith.constant 0 : index
    %c0_0 = arith.constant 0 : index
    %0 = vector.load %arg1[%c0, %c0_0] : memref<20x8xf32, #tpu.memory_space<vmem>>, vector<20x8xf32>
    %1 = arith.truncf %0 : vector<20x8xf32> to vector<20x8xbf16>
    %c0_1 = arith.constant 0 : index
    %c0_2 = arith.constant 0 : index
    %2 = vector.load %arg2[%c0_1, %c0_2] : memref<272x128xbf16, #tpu.memory_space<vmem>>, vector<8x128xbf16>
    %c16 = arith.constant 16 : index
    %c0_3 = arith.constant 0 : index
    %3 = vector.load %arg2[%c16, %c0_3] : memref<272x128xbf16, #tpu.memory_space<vmem>>, vector<128x128xbf16>
    %c144 = arith.constant 144 : index
    %c0_4 = arith.constant 0 : index
    %4 = vector.load %arg2[%c144, %c0_4] : memref<272x128xbf16, #tpu.memory_space<vmem>>, vector<128x128xbf16>
    %c0_5 = arith.constant 0 : index
    %c0_6 = arith.constant 0 : index
    %5 = vector.load %arg3[%c0_5, %c0_6] : memref<24x128xf32, #tpu.memory_space<vmem>>, vector<1x128xf32>
    %c8 = arith.constant 8 : index
    %c0_7 = arith.constant 0 : index
    %6 = vector.load %arg3[%c8, %c0_7] : memref<24x128xf32, #tpu.memory_space<vmem>>, vector<1x128xf32>
    %c16_8 = arith.constant 16 : index
    %c0_9 = arith.constant 0 : index
    %7 = vector.load %arg3[%c16_8, %c0_9] : memref<24x128xf32, #tpu.memory_space<vmem>>, vector<1x128xf32>
    %cst = arith.constant dense<0.000000e+00> : vector<20x128xf32>
    %8 = tpu.matmul %1, %2, %cst {dimension_numbers = #tpu.dot_dimension_numbers<[1], [0], [0], [1], [0, 0, 1, 1], [], []>} : vector<20x8xbf16>, vector<8x128xbf16>, vector<20x128xf32> -> vector<20x128xf32>
    %9 = vector.broadcast %5 : vector<1x128xf32> to vector<20x128xf32>
    %10 = arith.addf %8, %9 : vector<20x128xf32>
    %cst_10 = arith.constant 0.000000e+00 : f32
    %11 = vector.broadcast %cst_10 : f32 to vector<20x128xf32>
    %12 = arith.maximumf %10, %11 : vector<20x128xf32>
    %13 = arith.truncf %12 : vector<20x128xf32> to vector<20x128xbf16>
    %cst_11 = arith.constant dense<0.000000e+00> : vector<20x128xf32>
    %14 = tpu.matmul %13, %3, %cst_11 {dimension_numbers = #tpu.dot_dimension_numbers<[1], [0], [0], [1], [0, 0, 1, 1], [], []>} : vector<20x128xbf16>, vector<128x128xbf16>, vector<20x128xf32> -> vector<20x128xf32>
    %15 = vector.broadcast %6 : vector<1x128xf32> to vector<20x128xf32>
    %16 = arith.addf %14, %15 : vector<20x128xf32>
    %cst_12 = arith.constant 0.000000e+00 : f32
    %17 = vector.broadcast %cst_12 : f32 to vector<20x128xf32>
    %18 = arith.maximumf %16, %17 : vector<20x128xf32>
    %19 = arith.truncf %18 : vector<20x128xf32> to vector<20x128xbf16>
    %cst_13 = arith.constant dense<0.000000e+00> : vector<20x128xf32>
    %20 = tpu.matmul %19, %4, %cst_13 {dimension_numbers = #tpu.dot_dimension_numbers<[1], [0], [0], [1], [0, 0, 1, 1], [], []>} : vector<20x128xbf16>, vector<128x128xbf16>, vector<20x128xf32> -> vector<20x128xf32>
    %21 = vector.broadcast %7 : vector<1x128xf32> to vector<20x128xf32>
    %22 = arith.addf %20, %21 : vector<20x128xf32>
    %23 = arith.truncf %22 : vector<20x128xf32> to vector<20x128xbf16>
    %c0_14 = arith.constant 0 : index
    %c0_15 = arith.constant 0 : index
    %24 = vector.load %arg4[%c0_14, %c0_15] : memref<20x128xbf16, #tpu.memory_space<vmem>>, vector<20x128xbf16>
    tpu.vector_store %arg4[%c0_14, %c0_15], %23 {strides = array<i32>} : memref<20x128xbf16, #tpu.memory_space<vmem>>, vector<20x128xbf16>,
    return
  }
  func.func @transform_0(%arg0: i32) -> (i32, i32) {
    %c0_i32 = arith.constant 0 : i32
    %c0_i32_0 = arith.constant 0 : i32
    return %arg0, %c0_i32 : i32, i32
  }
  func.func @transform_1(%arg0: i32) -> (i32, i32) {
    %c0_i32 = arith.constant 0 : i32
    %c0_i32_0 = arith.constant 0 : i32
    %c0_i32_1 = arith.constant 0 : i32
    return %c0_i32, %c0_i32_0 : i32, i32
  }
  func.func @transform_2(%arg0: i32) -> (i32, i32) {
    %c0_i32 = arith.constant 0 : i32
    %c0_i32_0 = arith.constant 0 : i32
    %c0_i32_1 = arith.constant 0 : i32
    return %c0_i32, %c0_i32_0 : i32, i32
  }
  func.func @transform_3(%arg0: i32) -> (i32, i32) {
    %c0_i32 = arith.constant 0 : i32
    %c0_i32_0 = arith.constant 0 : i32
    return %arg0, %c0_i32 : i32, i32
  }
}

</mosaic_0001>

<llo_original>
// kernel: tpu_custom_call.1
$region0: #{tpu_custom_call.1}
  #allocation0 [shape = 'u32[]', space=smem, size = 0x4, offset = 0x4, fixed_abs, tag = 'smem constant byte address 0x4 - core index']
  #allocation1 [shape = 'u32[72,128]{1,0:T(1,128)}', space=vmem, size = 0x9000, scoped, tag = 'internal scratch']
  %s0 = inlined_call_operand.vmem [shape: f32[20,8], index: 0, kind: input, shape index: {}]
  %s1 = inlined_call_operand.hbm [shape: bf16[272,128], index: 1, kind: input, shape index: {}]
  %s2 = inlined_call_operand.vmem [shape: f32[24,128], index: 2, kind: input, shape index: {}]
  %s3 = inlined_call_operand.hbm [shape: bf16[20,128], index: 3, kind: output, shape index: {}]
  %s4 = sld [smem:[#allocation0]]
  $region26: #{tpu_custom_call.1} parent=0
    _
  %s6 = ssub.s32 1, %s4
  %s7 = scalar_select 0, %s6, %s4
  $region1: #{tpu_custom_call.1} parent=0
    #allocation2 [shape = 'u8[69632]{0}', space=vmem, size = 0x11000, scoped, tag = 'input window, operand 1, single buffered']
    #allocation3 [shape = 's32[1]{0}', space=sflag, size = 0x4, scoped, tag = 'scoped memory for tpu_custom_call.1']
    #allocation4 [shape = 's32[1]{0}', space=sflag, size = 0x4, scoped, tag = 'scoped memory for tpu_custom_call.1']
    #allocation5 [shape = 'u8[6144]{0}', space=vmem, size = 0x1800, scoped, tag = 'output window, operand 0, single buffered']
    %8 = vsyncpa [#allocation3], 0
    %9 = vsyncpa [#allocation4], 0
    // Predicated region
    $region2: #{tpu_custom_call.1} parent=1 // pred_check
      _
    $region3: #{tpu_custom_call.1} parent=1 // pred_check_branch
      %11 = sbr.rel (0) target = $region5
    $region4: #{tpu_custom_call.1} parent=1 // pred_region
      _
    $region5: #{tpu_custom_call.1} parent=1 // pred_fallthru
      _
    // Predicated region
    $region6: #{tpu_custom_call.1} parent=1 // pred_check
      _
    $region7: #{tpu_custom_call.1} parent=1 // pred_check_branch
      %13 = sbr.rel (0) target = $region9
    $region8: #{tpu_custom_call.1} parent=1 // pred_region
      %15 = vsyncadd [#allocation3], 0
      %s16 = sshll.u32 %s1, 4
      %s17 = int_to_ptr.hbm [resolvable:$true] %s16
      %s18 = sshll.u32 [#allocation2], 4
      %s19 = int_to_ptr.vmem [resolvable:$true] %s18
      %24 = dma.hbm_to_vmem [thread:$0]  %s17, 2176, %s19, [#allocation3], 64, 64, 4
    $region9: #{tpu_custom_call.1} parent=1 // pred_fallthru
      _
    // Predicated region
    $region10: #{tpu_custom_call.1} parent=1 // pred_check
      _
    $region11: #{tpu_custom_call.1} parent=1 // pred_check_branch
      %26 = sbr.rel (0) target = $region13
    $region12: #{tpu_custom_call.1} parent=1 // pred_region
      _
    $region13: #{tpu_custom_call.1} parent=1 // pred_fallthru
      _
    // Predicated region
    $region14: #{tpu_custom_call.1} parent=1 // pred_check
      _
    $region15: #{tpu_custom_call.1} parent=1 // pred_check_branch
      %28 = sbr.rel (0) target = $region17
    $region16: #{tpu_custom_call.1} parent=1 // pred_region
      %30 = dma.done [#allocation3], 2176
    $region17: #{tpu_custom_call.1} parent=1 // pred_fallthru
      _
    %v32 = vld [vmem:[%s0] sm:$0xff]
    %v33 = vld [vmem:[%s0 + $0x8] sm:$0xff]
    %v34 = vld [vmem:[%s0 + $0x10] sm:$0xf]
    %v35 = vpack.c.bf16 %v33, %v32
    %v36 = vpack.c.bf16 %v34, %v34
    %v37 = vld [vmem:[#allocation2] sm:$0xf]
    %v38 = vld [vmem:[#allocation2 + $0x8] sm:$0xf]
    %v39 = vld [vmem:[#allocation2 + $0xc] sm:$0xf]
    %v40 = vld [vmem:[#allocation2 + $0x10] sm:$0xf]
    %v41 = vld [vmem:[#allocation2 + $0x14] sm:$0xf]
    %v42 = vld [vmem:[#allocation2 + $0x18] sm:$0xf]
    %v43 = vld [vmem:[#allocation2 + $0x1c] sm:$0xf]
    %v44 = vld [vmem:[#allocation2 + $0x20] sm:$0xf]
    %v45 = vld [vmem:[#allocation2 + $0x24] sm:$0xf]
    %v46 = vld [vmem:[#allocation2 + $0x28] sm:$0xf]
    %v47 = vld [vmem:[#allocation2 + $0x2c] sm:$0xf]
    %v48 = vld [vmem:[#allocation2 + $0x30] sm:$0xf]
    %v49 = vld [vmem:[#allocation2 + $0x34] sm:$0xf]
    %v50 = vld [vmem:[#allocation2 + $0x38] sm:$0xf]
    %v51 = vld [vmem:[#allocation2 + $0x3c] sm:$0xf]
    %v52 = vld [vmem:[#allocation2 + $0x40] sm:$0xf]
    %v53 = vld [vmem:[#allocation2 + $0x44] sm:$0xf]
    %v54 = vld [vmem:[#allocation2 + $0x48] sm:$0xf]
    %v55 = vld [vmem:[#allocation2 + $0x4c] sm:$0xf]
    %v56 = vld [vmem:[#allocation2 + $0x50] sm:$0xf]
    %v57 = vld [vmem:[#allocation2 + $0x54] sm:$0xf]
    %v58 = vld [vmem:[#allocation2 + $0x58] sm:$0xf]
    %v59 = vld [vmem:[#allocation2 + $0x5c] sm:$0xf]
    %v60 = vld [vmem:[#allocation2 + $0x60] sm:$0xf]
    %v61 = vld [vmem:[#allocation2 + $0x64] sm:$0xf]
    %v62 = vld [vmem:[#allocation2 + $0x68] sm:$0xf]
    %v63 = vld [vmem:[#allocation2 + $0x6c] sm:$0xf]
    %v64 = vld [vmem:[#allocation2 + $0x70] sm:$0xf]
    %v65 = vld [vmem:[#allocation2 + $0x74] sm:$0xf]
    %v66 = vld [vmem:[#allocation2 + $0x78] sm:$0xf]
    %v67 = vld [vmem:[#allocation2 + $0x7c] sm:$0xf]
    %v68 = vld [vmem:[#allocation2 + $0x80] sm:$0xf]
    %v69 = vld [vmem:[#allocation2 + $0x84] sm:$0xf]
    %v70 = vld [vmem:[%s2] sm:$0x1]
    %v71 = vld [vmem:[%s2 + $0x8] sm:$0x1]
    %v72 = vld [vmem:[%s2 + $0x10] sm:$0x1]
    %v73 = vperm.slane %v70, 0
    %vm74 = vcmask 64512
    %v76 = vsel %vm74, %v35, 0
    %v79 = vsel %vm74, %v36, 0
    %vm81 = vcmask 1043456
    %v83 = vsel %vm81, %v37, 0
    %85 = vmatpush.bf16.msra.mxu0 0
    %86 = vmatpush.bf16.msra.mxu0 0
    %87 = vmatpush.bf16.msra.mxu0 0
    %88 = vmatpush.bf16.msra.mxu0 0
    %89 = vmatpush.bf16.msra.mxu0 0
    %90 = vmatpush.bf16.msra.mxu0 0
    %91 = vmatpush.bf16.msra.mxu0 0
    %92 = vmatpush.bf16.msra.mxu0 %v83
    %93 = vmatmul.bf16.gmra.mxu0 %v76
    %v94 = vpop.f32.mrf.mxu0
    %v95 = vadd.f32 %v73, %v94
    %v96 = vpop.f32.mrf.mxu0
    %v97 = vadd.f32 %v73, %v96
    %98 = vmatmul.bf16.gmra.mxu0 %v79
    %v99 = vpop.f32.mrf.mxu0
    %v100 = vadd.f32 %v73, %v99
    %v101 = vpop.f32.mrf.mxu0
    %102 = vdwg.mxu0
    %v103 = vmax.f32 %v95, 0.0
    %v104 = vmax.f32 %v97, 0.0
    %v105 = vmax.f32 %v100, 0.0
    %v106 = vpack.c.bf16 %v104, %v103
    %v107 = vpack.c.bf16 %v105, %v105
    %v108 = vperm.slane %v71, 0
    %v125 = vunpack.c.l.b16 %v38
    %v126 = vunpack.c.l.b16 %v39
    %v127 = vunpack.c.l.b16 %v40
    %v128 = vunpack.c.l.b16 %v41
    %v129 = vunpack.c.l.b16 %v42
    %v130 = vunpack.c.l.b16 %v43
    %v131 = vunpack.c.l.b16 %v44
    %v132 = vunpack.c.l.b16 %v45
    %v133 = vunpack.c.l.b16 %v46
    %v134 = vunpack.c.l.b16 %v47
    %v135 = vunpack.c.l.b16 %v48
    %v136 = vunpack.c.l.b16 %v49
    %v137 = vunpack.c.l.b16 %v50
    %v138 = vunpack.c.l.b16 %v51
    %v139 = vunpack.c.l.b16 %v52
    %v140 = vunpack.c.l.b16 %v53
    %v141 = vpack.c.b16 %v126, %v125
    %v142 = vpack.c.b16 %v128, %v127
    %v143 = vpack.c.b16 %v130, %v129
    %v144 = vpack.c.b16 %v132, %v131
    %v145 = vpack.c.b16 %v134, %v133
    %v146 = vpack.c.b16 %v136, %v135
    %v147 = vpack.c.b16 %v138, %v137
    %v148 = vpack.c.b16 %v140, %v139
    %157 = vmatpush.bf16.msra.mxu0 %v148
    %158 = vmatpush.bf16.msra.mxu0 %v147
    %159 = vmatpush.bf16.msra.mxu0 %v146
    %160 = vmatpush.bf16.msra.mxu0 %v145
    %161 = vmatpush.bf16.msra.mxu0 %v144
    %162 = vmatpush.bf16.msra.mxu0 %v143
    %163 = vmatpush.bf16.msra.mxu0 %v142
    %164 = vmatpush.bf16.msra.mxu0 %v141
    %165 = vmatmul.bf16.gmra.mxu0 %v106
    %v166 = vpop.f32.mrf.mxu0
    %v167 = vadd.f32 %v108, %v166
    %v168 = vpop.f32.mrf.mxu0
    %v169 = vadd.f32 %v108, %v168
    %170 = vmatmul.bf16.gmra.mxu0 %v107
    %v171 = vpop.f32.mrf.mxu0
    %v172 = vadd.f32 %v108, %v171
    %v173 = vpop.f32.mrf.mxu0
    %174 = vdwg.mxu0
    %v175 = vmax.f32 %v167, 0.0
    %v176 = vmax.f32 %v169, 0.0
    %v177 = vmax.f32 %v172, 0.0
    %v178 = vpack.c.bf16 %v176, %v175
    %v179 = vpack.c.bf16 %v177, %v177
    %v180 = vperm.slane %v72, 0
    %v197 = vunpack.c.l.b16 %v54
    %v198 = vunpack.c.l.b16 %v55
    %v199 = vunpack.c.l.b16 %v56
    %v200 = vunpack.c.l.b16 %v57
    %v201 = vunpack.c.l.b16 %v58
    %v202 = vunpack.c.l.b16 %v59
    %v203 = vunpack.c.l.b16 %v60
    %v204 = vunpack.c.l.b16 %v61
    %v205 = vunpack.c.l.b16 %v62
    %v206 = vunpack.c.l.b16 %v63
    %v207 = vunpack.c.l.b16 %v64
    %v208 = vunpack.c.l.b16 %v65
    %v209 = vunpack.c.l.b16 %v66
    %v210 = vunpack.c.l.b16 %v67
    %v211 = vunpack.c.l.b16 %v68
    %v212 = vunpack.c.l.b16 %v69
    %v213 = vpack.c.b16 %v198, %v197
    %v214 = vpack.c.b16 %v200, %v199
    %v215 = vpack.c.b16 %v202, %v201
    %v216 = vpack.c.b16 %v204, %v203
    %v217 = vpack.c.b16 %v206, %v205
    %v218 = vpack.c.b16 %v208, %v207
    %v219 = vpack.c.b16 %v210, %v209
    %v220 = vpack.c.b16 %v212, %v211
    %229 = vmatpush.bf16.msra.mxu0 %v220
    %230 = vmatpush.bf16.msra.mxu0 %v219
    %231 = vmatpush.bf16.msra.mxu0 %v218
    %232 = vmatpush.bf16.msra.mxu0 %v217
    %233 = vmatpush.bf16.msra.mxu0 %v216
    %234 = vmatpush.bf16.msra.mxu0 %v215
    %235 = vmatpush.bf16.msra.mxu0 %v214
    %236 = vmatpush.bf16.msra.mxu0 %v213
    %237 = vmatmul.bf16.gmra.mxu0 %v178
    %v238 = vpop.f32.mrf.mxu0
    %v239 = vadd.f32 %v180, %v238
    %v240 = vpop.f32.mrf.mxu0
    %v241 = vadd.f32 %v180, %v240
    %242 = vmatmul.bf16.gmra.mxu0 %v179
    %v243 = vpop.f32.mrf.mxu0
    %v244 = vadd.f32 %v180, %v243
    %v245 = vpop.f32.mrf.mxu0
    %246 = vdwg.mxu0
    %v247 = vpack.c.bf16 %v239, %v239
    %v248 = vpack.c.bf16 %v241, %v241
    %v249 = vpack.c.bf16 %v244, %v244
    %250 = vst [vmem:[#allocation5] sm:$0xf] %v247
    %251 = vst [vmem:[#allocation5 + $0x4] sm:$0xf] %v248
    %252 = vst [vmem:[#allocation5 + $0x8] sm:$0x3] %v249
    // Predicated region
    $region18: #{tpu_custom_call.1} parent=1 // pred_check
      _
    $region19: #{tpu_custom_call.1} parent=1 // pred_check_branch
      %254 = sbr.rel (0) target = $region21
    $region20: #{tpu_custom_call.1} parent=1 // pred_region
      %256 = vsyncadd [#allocation4], 0
      %s257 = sshll.u32 [#allocation5], 4
      %s258 = int_to_ptr.vmem [resolvable:$true] %s257
      %s259 = sshll.u32 %s3, 4
      %s260 = int_to_ptr.hbm [resolvable:$true] %s259
      %265 = dma.vmem_to_hbm [thread:$0]  %s258, 192, %s260, [#allocation4], 64, 64, 4
    $region21: #{tpu_custom_call.1} parent=1 // pred_fallthru
      _
    // Predicated region
    $region22: #{tpu_custom_call.1} parent=1 // pred_check
      _
    $region23: #{tpu_custom_call.1} parent=1 // pred_check_branch
      %267 = sbr.rel (0) target = $region25
    $region24: #{tpu_custom_call.1} parent=1 // pred_region
      %269 = dma.done [#allocation4], 192
    $region25: #{tpu_custom_call.1} parent=1 // pred_fallthru
      _
    %270 = vsyncpa [#allocation3], 1
    %271 = vsyncpa [#allocation4], 1

</llo_original>
